<compile_context>
chip_gen: v7x
topology: tpu7x:2x2x1
jax: 0.10.0
libtpu: 0.0.40
codegen_flags: <defaults>
</compile_context>

<pallas_src>
import jax
import jax.numpy as jnp
from jax.experimental import pallas as pl
from jax.experimental.pallas import tpu as pltpu


def _round_up(x: int, m: int) -> int:
    return -(-x // m) * m


def _vmem_budget_bytes() -> int:
    """Per-generation VMEM budget for the table-resident fast path."""
    try:
        cap = int(pltpu.get_tpu_info().vmem_capacity_bytes)
    except Exception:
        cap = 64 * 1024 * 1024                # assume the smallest (v7x) if unknown
    # ~48 MiB on v7x (64 MiB physical), ~96 MiB on v5e/v6e (128 MiB physical).
    return max(32 * 1024 * 1024, min(int(cap * 0.75), 100 * 1024 * 1024))


def _choose_tile_b(B: int, tile_b: int) -> int:
    tb = _round_up(min(int(tile_b), _round_up(B, 8)), 8)
    # Large batches: make sure there are >= 2 batch tiles so the "parallel"
    # grid axis can actually split across v7x's two TensorCores.
    if B >= 256 and -(-B // tb) < 2:
        tb = _round_up(-(-B // 2), 128)
    return tb


# ---------------------------------------------------------------------------
# Path A: tables resident in VMEM, gather = one-hot matmul on the MXU.
# ---------------------------------------------------------------------------
def _bpr_vmem_kernel(u_idx_ref, p_idx_ref, n_idx_ref,     # (tb, 1) int32 VMEM blocks
                     user_tab_ref, item_tab_ref,          # full tables, VMEM resident
                     pos_ref, neg_ref):                   # (tb, 1) f32 VMEM blocks
    tb = pos_ref.shape[0]
    user_tab = user_tab_ref[...]
    item_tab = item_tab_ref[...]

    def gather(tab, idx_col):
        # One-hot row gather on the MXU: no per-row DMAs, no reliance on a
        # dynamic-gather lowering.  onehot is exact (0/1), so results match
        # a plain embedding lookup bit-for-bit up to the final f32 reduce.
        n = tab.shape[0]
        rows = jax.lax.broadcasted_iota(jnp.int32, (tb, n), 1)
        onehot = (rows == idx_col).astype(tab.dtype)
        return jnp.dot(onehot, tab, preferred_element_type=jnp.float32)

    u = gather(user_tab, u_idx_ref[...])
    i = gather(item_tab, p_idx_ref[...])
    j = gather(item_tab, n_idx_ref[...])

    pos_ref[...] = jnp.sum(u * i, axis=1, keepdims=True)
    neg_ref[...] = jnp.sum(u * j, axis=1, keepdims=True)


# ---------------------------------------------------------------------------
# Path B: tables stay in HBM, per-row DMA gather double-buffered across tiles.
# ---------------------------------------------------------------------------
def _bpr_hbm_kernel(u_idx_ref, p_idx_ref, n_idx_ref,      # SMEM scalar-prefetch indices
                    user_tab_ref, item_tab_ref,           # HBM tables (pl.ANY)
                    pos_ref, neg_ref,                     # (tb, 1) f32 VMEM blocks
                    u_buf, i_buf, j_buf, sem):            # (2, tb, D) x3, DMA sems (2,3)
    tb = pos_ref.shape[0]
    t = pl.program_id(0)
    nt = pl.num_programs(0)
    slot = t % 2
    nxt = 1 - slot

    def issue_tile(tile, s):
        base = tile * tb

        @pl.loop(0, tb, unroll=min(8, tb))
        def _issue(r):
            k = base + r
            pltpu.make_async_copy(user_tab_ref.at[pl.ds(u_idx_ref[k], 1)],
                                  u_buf.at[s, pl.ds(r, 1)], sem.at[s, 0]).start()
            pltpu.make_async_copy(item_tab_ref.at[pl.ds(p_idx_ref[k], 1)],
                                  i_buf.at[s, pl.ds(r, 1)], sem.at[s, 1]).start()
            pltpu.make_async_copy(item_tab_ref.at[pl.ds(n_idx_ref[k], 1)],
                                  j_buf.at[s, pl.ds(r, 1)], sem.at[s, 2]).start()

    # Prime the pipeline: tile 0 -> slot 0 (grid axis is "arbitrary", i.e.
    # strictly sequential, so cross-step double buffering is safe).
    @pl.when(t == 0)
    def _prime():
        issue_tile(0, 0)

    # Prefetch the next tile's rows into the other slot before draining ours.
    @pl.when(t + 1 < nt)
    def _prefetch():
        issue_tile(t + 1, nxt)

    # Coalesced drain: each table's tb row copies signal one semaphore with
    # D*itemsize bytes apiece, so a single whole-(tb, D)-buffer descriptor
    # waits for all of them at once (one wait per table instead of 3*tb).
    pltpu.make_async_copy(u_buf.at[slot], u_buf.at[slot], sem.at[slot, 0]).wait()
    pltpu.make_async_copy(i_buf.at[slot], i_buf.at[slot], sem.at[slot, 1]).wait()
    pltpu.make_async_copy(j_buf.at[slot], j_buf.at[slot], sem.at[slot, 2]).wait()

    u = u_buf[slot].astype(jnp.float32)
    i = i_buf[slot].astype(jnp.float32)
    j = j_buf[slot].astype(jnp.float32)
    pos_ref[...] = jnp.sum(u * i, axis=1, keepdims=True)
    neg_ref[...] = jnp.sum(u * j, axis=1, keepdims=True)


# ---------------------------------------------------------------------------
# Wrapper
# ---------------------------------------------------------------------------
def bpr_forward(batch_user, batch_pos_item, batch_neg_item, user_emb, item_emb,
                *, tile_b=256, force_hbm_gather=False):
    """Pallas BPR.forward -> (pos_score, neg_score), each (B, 1) float32."""
    B = int(batch_user.shape[0])
    Nu, D = (int(s) for s in user_emb.shape)
    Ni = int(item_emb.shape[0])
    itemsize = jnp.dtype(user_emb.dtype).itemsize

    tb = _choose_tile_b(B, tile_b)
    nt = -(-B // tb)
    b_pad = nt * tb

    def prep(idx):
        idx = idx.astype(jnp.int32).reshape(B)
        if b_pad != B:
            idx = jnp.pad(idx, (0, b_pad - B))   # pad with valid row 0; sliced off below
        return idx

    u_idx, p_idx, n_idx = prep(batch_user), prep(batch_pos_item), prep(batch_neg_item)

    out_sd = jax.ShapeDtypeStruct((b_pad, 1), jnp.float32)

    budget = _vmem_budget_bytes()
    # Fast-path VMEM estimate: tables (possibly double-buffered by the pipeline),
    # one-hot operands, gathered rows, plus slack.
    fast_bytes = (2 * (Nu + Ni) * D * itemsize
                  + 4 * tb * max(Nu, Ni) * 4
                  + 8 * tb * D * 4
                  + (2 << 20))
    use_fast = ((not force_hbm_gather)
                and fast_bytes <= budget
                and max(Nu, Ni) <= 32768)

    if use_fast:
        grid_spec = pltpu.PrefetchScalarGridSpec(
            num_scalar_prefetch=0,
            grid=(nt,),
            in_specs=[pl.BlockSpec((tb, 1), lambda t: (t, 0)),
                      pl.BlockSpec((tb, 1), lambda t: (t, 0)),
                      pl.BlockSpec((tb, 1), lambda t: (t, 0)),
                      # Full tables, constant index map -> copied to VMEM once,
                      # never re-fetched across batch tiles.
                      pl.BlockSpec((Nu, D), lambda t: (0, 0)),
                      pl.BlockSpec((Ni, D), lambda t: (0, 0))],
            out_specs=[pl.BlockSpec((tb, 1), lambda t: (t, 0)),
                       pl.BlockSpec((tb, 1), lambda t: (t, 0))],
        )
        pos, neg = pl.pallas_call(
            _bpr_vmem_kernel,
            out_shape=(out_sd, out_sd),
            grid_spec=grid_spec,
            compiler_params=pltpu.CompilerParams(
                dimension_semantics=("parallel",),     # batch tiles split across TCs
                vmem_limit_bytes=budget),
        )(u_idx.reshape(b_pad, 1), p_idx.reshape(b_pad, 1), n_idx.reshape(b_pad, 1),
          user_emb, item_emb)
    else:
        grid_spec = pltpu.PrefetchScalarGridSpec(
            num_scalar_prefetch=3,
            grid=(nt,),
            in_specs=[pl.BlockSpec(memory_space=pl.ANY),    # user table stays in HBM
                      pl.BlockSpec(memory_space=pl.ANY)],   # item table stays in HBM
            out_specs=[pl.BlockSpec((tb, 1), lambda t, u, p, n: (t, 0)),
                       pl.BlockSpec((tb, 1), lambda t, u, p, n: (t, 0))],
            scratch_shapes=[pltpu.VMEM((2, tb, D), user_emb.dtype),
                            pltpu.VMEM((2, tb, D), item_emb.dtype),
                            pltpu.VMEM((2, tb, D), item_emb.dtype),
                            pltpu.SemaphoreType.DMA((2, 3))],
        )
        pos, neg = pl.pallas_call(
            _bpr_hbm_kernel,
            out_shape=(out_sd, out_sd),
            grid_spec=grid_spec,
            compiler_params=pltpu.CompilerParams(
                # Sequential grid: double buffering carries DMA state across steps.
                dimension_semantics=("arbitrary",),
                vmem_limit_bytes=32 * 1024 * 1024),
        )(u_idx, p_idx, n_idx, user_emb, item_emb)

    return pos[:B], neg[:B]


if __name__ == "__main__":
    num_user, num_item, emb_dim = 64, 128, 32
    B = 8

    key = jax.random.PRNGKey(0)
    k_ue, k_ie, k_u, k_p, k_n = jax.random.split(key, 5)

    # nn.init.normal_(weight, mean=0.0, std=0.01)
    user_emb = 0.01 * jax.random.normal(k_ue, (num_user, emb_dim), dtype=jnp.float32)
    item_emb = 0.01 * jax.random.normal(k_ie, (num_item, emb_dim), dtype=jnp.float32)

    batch_user = jax.random.randint(k_u, (B,), 0, num_user, dtype=jnp.int32)
    batch_pos = jax.random.randint(k_p, (B,), 0, num_item, dtype=jnp.int32)
    batch_neg = jax.random.randint(k_n, (B,), 0, num_item, dtype=jnp.int32)

    # Pure-JAX reference.
    u = jnp.take(user_emb, batch_user, axis=0)
    i = jnp.take(item_emb, batch_pos, axis=0)
    j = jnp.take(item_emb, batch_neg, axis=0)
    pos_ref_v = jnp.sum(u * i, axis=1, keepdims=True)
    neg_ref_v = jnp.sum(u * j, axis=1, keepdims=True)

    # Fast path (tables VMEM-resident, one-hot MXU gather) — auto-selected here.
    pos, neg = jax.block_until_ready(
        bpr_forward(batch_user, batch_pos, batch_neg, user_emb, item_emb))
    assert pos.shape == (B, 1) and neg.shape == (B, 1)
    assert jnp.allclose(pos, pos_ref_v, atol=1e-6)
    assert jnp.allclose(neg, neg_ref_v, atol=1e-6)

    # Fallback path (tables in HBM, double-buffered row-gather DMAs, coalesced waits).
    pos2, neg2 = jax.block_until_ready(
        bpr_forward(batch_user, batch_pos, batch_neg, user_emb, item_emb,
                    force_hbm_gather=True))
    assert jnp.allclose(pos2, pos_ref_v, atol=1e-6)
    assert jnp.allclose(neg2, neg_ref_v, atol=1e-6)

    print("KERNEL_OK")
</pallas_src>

<mosaic_0001>
module attributes {stable_mosaic.version = 11 : i64} {
  func.func @_bpr_vmem_kernel(%arg0: i32, %arg1: memref<8x1xi32, #tpu.memory_space<vmem>>, %arg2: memref<8x1xi32, #tpu.memory_space<vmem>>, %arg3: memref<8x1xi32, #tpu.memory_space<vmem>>, %arg4: memref<64x32xf32, #tpu.memory_space<vmem>>, %arg5: memref<128x32xf32, #tpu.memory_space<vmem>>, %arg6: memref<8x1xf32, #tpu.memory_space<vmem>>, %arg7: memref<8x1xf32, #tpu.memory_space<vmem>>) attributes {dimension_semantics = [#tpu.dimension_semantics<parallel>], iteration_bounds = array<i64: 1>, scalar_prefetch = 0 : i64, scratch_operands = 0 : i64, tpu.core_type = #tpu.core_type<tc>, window_params = [{transform_indices = @transform_0, window_bounds = array<i64: 8, 1>}, {transform_indices = @transform_1, window_bounds = array<i64: 8, 1>}, {transform_indices = @transform_2, window_bounds = array<i64: 8, 1>}, {pipeline_mode = #tpu.pipeline_mode<synchronous>, transform_indices = @transform_3, window_bounds = array<i64: 64, 32>}, {pipeline_mode = #tpu.pipeline_mode<synchronous>, transform_indices = @transform_4, window_bounds = array<i64: 128, 32>}, {transform_indices = @transform_5, window_bounds = array<i64: 8, 1>}, {transform_indices = @transform_6, window_bounds = array<i64: 8, 1>}]} {
    %c0 = arith.constant 0 : index
    %c0_0 = arith.constant 0 : index
    %0 = vector.load %arg4[%c0, %c0_0] : memref<64x32xf32, #tpu.memory_space<vmem>>, vector<64x32xf32>
    %c0_1 = arith.constant 0 : index
    %c0_2 = arith.constant 0 : index
    %1 = vector.load %arg5[%c0_1, %c0_2] : memref<128x32xf32, #tpu.memory_space<vmem>>, vector<128x32xf32>
    %c0_3 = arith.constant 0 : index
    %c0_4 = arith.constant 0 : index
    %2 = vector.load %arg1[%c0_3, %c0_4] : memref<8x1xi32, #tpu.memory_space<vmem>>, vector<8x1xi32>
    %3 = tpu.iota {dimensions = array<i32: 1>} : vector<8x64xi32>
    %4 = vector.broadcast %2 : vector<8x1xi32> to vector<8x64xi32>
    %5 = arith.cmpi eq, %3, %4 : vector<8x64xi32>
    %6 = arith.extui %5 : vector<8x64xi1> to vector<8x64xi32>
    %7 = arith.sitofp %6 : vector<8x64xi32> to vector<8x64xf32>
    %cst = arith.constant dense<0.000000e+00> : vector<8x32xf32>
    %8 = tpu.matmul %7, %0, %cst {dimension_numbers = #tpu.dot_dimension_numbers<[1], [0], [0], [1], [0, 0, 1, 1], [], []>} : vector<8x64xf32>, vector<64x32xf32>, vector<8x32xf32> -> vector<8x32xf32>
    %c0_5 = arith.constant 0 : index
    %c0_6 = arith.constant 0 : index
    %9 = vector.load %arg2[%c0_5, %c0_6] : memref<8x1xi32, #tpu.memory_space<vmem>>, vector<8x1xi32>
    %10 = tpu.iota {dimensions = array<i32: 1>} : vector<8x128xi32>
    %11 = vector.broadcast %9 : vector<8x1xi32> to vector<8x128xi32>
    %12 = arith.cmpi eq, %10, %11 : vector<8x128xi32>
    %13 = arith.extui %12 : vector<8x128xi1> to vector<8x128xi32>
    %14 = arith.sitofp %13 : vector<8x128xi32> to vector<8x128xf32>
    %cst_7 = arith.constant dense<0.000000e+00> : vector<8x32xf32>
    %15 = tpu.matmul %14, %1, %cst_7 {dimension_numbers = #tpu.dot_dimension_numbers<[1], [0], [0], [1], [0, 0, 1, 1], [], []>} : vector<8x128xf32>, vector<128x32xf32>, vector<8x32xf32> -> vector<8x32xf32>
    %c0_8 = arith.constant 0 : index
    %c0_9 = arith.constant 0 : index
    %16 = vector.load %arg3[%c0_8, %c0_9] : memref<8x1xi32, #tpu.memory_space<vmem>>, vector<8x1xi32>
    %17 = tpu.iota {dimensions = array<i32: 1>} : vector<8x128xi32>
    %18 = vector.broadcast %16 : vector<8x1xi32> to vector<8x128xi32>
    %19 = arith.cmpi eq, %17, %18 : vector<8x128xi32>
    %20 = arith.extui %19 : vector<8x128xi1> to vector<8x128xi32>
    %21 = arith.sitofp %20 : vector<8x128xi32> to vector<8x128xf32>
    %cst_10 = arith.constant dense<0.000000e+00> : vector<8x32xf32>
    %22 = tpu.matmul %21, %1, %cst_10 {dimension_numbers = #tpu.dot_dimension_numbers<[1], [0], [0], [1], [0, 0, 1, 1], [], []>} : vector<8x128xf32>, vector<128x32xf32>, vector<8x32xf32> -> vector<8x32xf32>
    %23 = arith.mulf %8, %15 : vector<8x32xf32>
    %cst_11 = arith.constant dense<0.000000e+00> : vector<8xf32>
    %24 = vector.multi_reduction <add>, %23, %cst_11 [1] : vector<8x32xf32> to vector<8xf32>
    %25 = vector.shape_cast %24 : vector<8xf32> to vector<8x1xf32>
    %c0_12 = arith.constant 0 : index
    %c0_13 = arith.constant 0 : index
    %26 = vector.load %arg6[%c0_12, %c0_13] : memref<8x1xf32, #tpu.memory_space<vmem>>, vector<8x1xf32>
    tpu.vector_store %arg6[%c0_12, %c0_13], %25 {strides = array<i32>} : memref<8x1xf32, #tpu.memory_space<vmem>>, vector<8x1xf32>,
    %27 = arith.mulf %8, %22 : vector<8x32xf32>
    %cst_14 = arith.constant dense<0.000000e+00> : vector<8xf32>
    %28 = vector.multi_reduction <add>, %27, %cst_14 [1] : vector<8x32xf32> to vector<8xf32>
    %29 = vector.shape_cast %28 : vector<8xf32> to vector<8x1xf32>
    %c0_15 = arith.constant 0 : index
    %c0_16 = arith.constant 0 : index
    %30 = vector.load %arg7[%c0_15, %c0_16] : memref<8x1xf32, #tpu.memory_space<vmem>>, vector<8x1xf32>
    tpu.vector_store %arg7[%c0_15, %c0_16], %29 {strides = array<i32>} : memref<8x1xf32, #tpu.memory_space<vmem>>, vector<8x1xf32>,
    return
  }
  func.func @transform_0(%arg0: i32) -> (i32, i32) {
    %c0_i32 = arith.constant 0 : i32
    %c0_i32_0 = arith.constant 0 : i32
    return %arg0, %c0_i32 : i32, i32
  }
  func.func @transform_1(%arg0: i32) -> (i32, i32) {
    %c0_i32 = arith.constant 0 : i32
    %c0_i32_0 = arith.constant 0 : i32
    return %arg0, %c0_i32 : i32, i32
  }
  func.func @transform_2(%arg0: i32) -> (i32, i32) {
    %c0_i32 = arith.constant 0 : i32
    %c0_i32_0 = arith.constant 0 : i32
    return %arg0, %c0_i32 : i32, i32
  }
  func.func @transform_3(%arg0: i32) -> (i32, i32) {
    %c0_i32 = arith.constant 0 : i32
    %c0_i32_0 = arith.constant 0 : i32
    %c0_i32_1 = arith.constant 0 : i32
    return %c0_i32, %c0_i32_0 : i32, i32
  }
  func.func @transform_4(%arg0: i32) -> (i32, i32) {
    %c0_i32 = arith.constant 0 : i32
    %c0_i32_0 = arith.constant 0 : i32
    %c0_i32_1 = arith.constant 0 : i32
    return %c0_i32, %c0_i32_0 : i32, i32
  }
  func.func @transform_5(%arg0: i32) -> (i32, i32) {
    %c0_i32 = arith.constant 0 : i32
    %c0_i32_0 = arith.constant 0 : i32
    return %arg0, %c0_i32 : i32, i32
  }
  func.func @transform_6(%arg0: i32) -> (i32, i32) {
    %c0_i32 = arith.constant 0 : i32
    %c0_i32_0 = arith.constant 0 : i32
    return %arg0, %c0_i32 : i32, i32
  }
}

</mosaic_0001>

<llo_original>
// kernel: tpu_custom_call.1
$region0: #{tpu_custom_call.1}
  #allocation0 [shape = 'u32[]', space=smem, size = 0x4, offset = 0x4, fixed_abs, tag = 'smem constant byte address 0x4 - core index']
  #allocation1 [shape = 'u32[144,128]{1,0:T(1,128)}', space=vmem, size = 0x12000, scoped, tag = 'internal scratch']
  %s0 = inlined_call_operand.vmem [shape: s32[8,1], index: 0, kind: input, shape index: {}]
  %s1 = inlined_call_operand.vmem [shape: s32[8,1], index: 1, kind: input, shape index: {}]
  %s2 = inlined_call_operand.vmem [shape: s32[8,1], index: 2, kind: input, shape index: {}]
  %s3 = inlined_call_operand.vmem [shape: f32[64,32], index: 3, kind: input, shape index: {}]
  %s4 = inlined_call_operand.vmem [shape: f32[128,32], index: 4, kind: input, shape index: {}]
  %s5 = inlined_call_operand.vmem [shape: f32[8,1], index: 5, kind: output, shape index: {0}]
  %s6 = inlined_call_operand.vmem [shape: f32[8,1], index: 6, kind: output, shape index: {1}]
  %7 = xla_tuple %s5, %s6
  %s8 = sld [smem:[#allocation0]]
  $region38: #{tpu_custom_call.1} parent=0
    _
  %s10 = ssub.s32 1, %s8
  %s11 = scalar_select 0, %s10, %s8
  // Predicated region
  $region2: #{tpu_custom_call.1} parent=0 // pred_check
    _
  $region3: #{tpu_custom_call.1} parent=0 // pred_check_branch
    %13 = sbr.rel (0) target = $region5
  $region4: #{tpu_custom_call.1} parent=0 // pred_region
    _
  $region5: #{tpu_custom_call.1} parent=0 // pred_fallthru
    _
  // Predicated region
  $region6: #{tpu_custom_call.1} parent=0 // pred_check
    _
  $region7: #{tpu_custom_call.1} parent=0 // pred_check_branch
    %15 = sbr.rel (0) target = $region9
  $region8: #{tpu_custom_call.1} parent=0 // pred_region
    _
  $region9: #{tpu_custom_call.1} parent=0 // pred_fallthru
    _
  // Predicated region
  $region10: #{tpu_custom_call.1} parent=0 // pred_check
    _
  $region11: #{tpu_custom_call.1} parent=0 // pred_check_branch
    %17 = sbr.rel (0) target = $region13
  $region12: #{tpu_custom_call.1} parent=0 // pred_region
    _
  $region13: #{tpu_custom_call.1} parent=0 // pred_fallthru
    _
  // Predicated region
  $region14: #{tpu_custom_call.1} parent=0 // pred_check
    _
  $region15: #{tpu_custom_call.1} parent=0 // pred_check_branch
    %19 = sbr.rel (0) target = $region17
  $region16: #{tpu_custom_call.1} parent=0 // pred_region
    _
  $region17: #{tpu_custom_call.1} parent=0 // pred_fallthru
    _
  // Predicated region
  $region18: #{tpu_custom_call.1} parent=0 // pred_check
    _
  $region19: #{tpu_custom_call.1} parent=0 // pred_check_branch
    %21 = sbr.rel (0) target = $region21
  $region20: #{tpu_custom_call.1} parent=0 // pred_region
    _
  $region21: #{tpu_custom_call.1} parent=0 // pred_fallthru
    _
  %v22 = vld [vmem:[%s3] sm:$0xff]
  %v23 = vld [vmem:[%s3 + $0x8] sm:$0xff]
  %v24 = vld [vmem:[%s3 + $0x10] sm:$0xff]
  %v25 = vld [vmem:[%s3 + $0x18] sm:$0xff]
  %v26 = vld [vmem:[%s3 + $0x20] sm:$0xff]
  %v27 = vld [vmem:[%s3 + $0x28] sm:$0xff]
  %v28 = vld [vmem:[%s3 + $0x30] sm:$0xff]
  %v29 = vld [vmem:[%s3 + $0x38] sm:$0xff]
  %v30 = vld [vmem:[%s4] sm:$0xff]
  %v31 = vld [vmem:[%s4 + $0x8] sm:$0xff]
  %v32 = vld [vmem:[%s4 + $0x10] sm:$0xff]
  %v33 = vld [vmem:[%s4 + $0x18] sm:$0xff]
  %v34 = vld [vmem:[%s4 + $0x20] sm:$0xff]
  %v35 = vld [vmem:[%s4 + $0x28] sm:$0xff]
  %v36 = vld [vmem:[%s4 + $0x30] sm:$0xff]
  %v37 = vld [vmem:[%s4 + $0x38] sm:$0xff]
  %v38 = vld [vmem:[%s4 + $0x40] sm:$0xff]
  %v39 = vld [vmem:[%s4 + $0x48] sm:$0xff]
  %v40 = vld [vmem:[%s4 + $0x50] sm:$0xff]
  %v41 = vld [vmem:[%s4 + $0x58] sm:$0xff]
  %v42 = vld [vmem:[%s4 + $0x60] sm:$0xff]
  %v43 = vld [vmem:[%s4 + $0x68] sm:$0xff]
  %v44 = vld [vmem:[%s4 + $0x70] sm:$0xff]
  %v45 = vld [vmem:[%s4 + $0x78] sm:$0xff]
  %v46 = vld [vmem:[%s0] sm:$0xff]
  %v47 = vlaneseq
  %v48 = vand.u32 %v47, 127
  %49 = vset.pattern.permute.xlu0 0
  %50 = vperm.xlu0 %49, %v46
  %v51 = vpop.permute.xlu0 %50
  %vm52 = vcmp.eq.s32.totalorder %v48, %v51
  %v53 = vsel %vm52, 1, 0
  %v54 = vcvt.s32.f32 %v53
  %vm55 = vcmask 523264
  %v57 = vsel %vm55, %v54, 0
  %59 = vmatprep.subr.mxu0 0.0
  %60 = vmatpush1.msra.mxu0 %v22
  %61 = vmatprep.subr.mxu0 0.0
  %62 = vmatpush1.msra.mxu0 %v23
  %63 = vmatprep.subr.mxu0 0.0
  %64 = vmatpush1.msra.mxu0 %v24
  %65 = vmatprep.subr.mxu0 0.0
  %66 = vmatpush1.msra.mxu0 %v25
  %67 = vmatprep.subr.mxu0 0.0
  %68 = vmatpush1.msra.mxu0 %v26
  %69 = vmatprep.subr.mxu0 0.0
  %70 = vmatpush1.msra.mxu0 %v27
  %71 = vmatprep.subr.mxu0 0.0
  %72 = vmatpush1.msra.mxu0 %v28
  %73 = vmatprep.subr.mxu0 0.0
  %74 = vmatpush1.msra.mxu0 %v29
  %75 = vmatprep.subr.mxu0 0.0
  %76 = vmatpush1.msra.mxu0 0.0
  %77 = vmatprep.subr.mxu0 0.0
  %78 = vmatpush1.msra.mxu0 0.0
  %79 = vmatprep.subr.mxu0 0.0
  %80 = vmatpush1.msra.mxu0 0.0
  %81 = vmatprep.subr.mxu0 0.0
  %82 = vmatpush1.msra.mxu0 0.0
  %83 = vmatprep.subr.mxu0 0.0
  %84 = vmatpush1.msra.mxu0 0.0
  %85 = vmatprep.subr.mxu0 0.0
  %86 = vmatpush1.msra.mxu0 0.0
  %87 = vmatprep.subr.mxu0 0.0
  %88 = vmatpush1.msra.mxu0 0.0
  %89 = vmatprep.subr.mxu0 0.0
  %90 = vmatpush1.msra.mxu0 0.0
  %91 = vmatprep.subr.mxu0 0.0
  %92 = vmatpush1.msra.mxu0 0.0
  %93 = vmatprep.subr.mxu0 0.0
  %94 = vmatpush1.msra.mxu0 0.0
  %95 = vmatprep.subr.mxu0 0.0
  %96 = vmatpush1.msra.mxu0 0.0
  %97 = vmatprep.subr.mxu0 0.0
  %98 = vmatpush1.msra.mxu0 0.0
  %99 = vmatprep.subr.mxu0 0.0
  %100 = vmatpush1.msra.mxu0 0.0
  %101 = vmatprep.subr.mxu0 0.0
  %102 = vmatpush1.msra.mxu0 0.0
  %103 = vmatprep.subr.mxu0 0.0
  %104 = vmatpush1.msra.mxu0 0.0
  %105 = vmatprep.subr.mxu0 0.0
  %106 = vmatpush1.msra.mxu0 0.0
  %107 = vmatprep.subr.mxu0 0.0
  %108 = vmatpush1.msra.mxu0 0.0
  %109 = vmatprep.subr.mxu0 0.0
  %110 = vmatpush1.msra.mxu0 0.0
  %111 = vmatprep.subr.mxu0 0.0
  %112 = vmatpush1.msra.mxu0 0.0
  %113 = vmatprep.subr.mxu0 0.0
  %114 = vmatpush1.msra.mxu0 0.0
  %115 = vmatprep.subr.mxu0 0.0
  %116 = vmatpush1.msra.mxu0 0.0
  %117 = vmatprep.subr.mxu0 0.0
  %118 = vmatpush1.msra.mxu0 0.0
  %119 = vmatprep.subr.mxu0 0.0
  %120 = vmatpush1.msra.mxu0 0.0
  %121 = vmatprep.subr.mxu0 0.0
  %122 = vmatpush1.msra.mxu0 0.0
  %123 = vmatprep.mubr.f32.mxu0 0.0
  %124 = vmatmul.mubr.f32.gmra.mrb[0].mxu0 %v57
  %v125 = vpop.f32.mrb[0].mxu0
  %v126 = vadd.f32 0.0, %v125
  %v127 = vpop.f32.mrb[0].mxu0
  %128 = vdwg.mxu0
  %v129 = vld [vmem:[%s1] sm:$0xff]
  %130 = vset.pattern.permute.xlu0 0
  %131 = vperm.xlu0 %130, %v129
  %v132 = vpop.permute.xlu0 %131
  %vm133 = vcmp.eq.s32.totalorder %v48, %v132
  %v134 = vsel %vm133, 1, 0
  %v135 = vcvt.s32.f32 %v134
  %136 = vmatprep.subr.mxu0 0.0
  %137 = vmatpush1.msra.mxu0 %v30
  %138 = vmatprep.subr.mxu0 0.0
  %139 = vmatpush1.msra.mxu0 %v31
  %140 = vmatprep.subr.mxu0 0.0
  %141 = vmatpush1.msra.mxu0 %v32
  %142 = vmatprep.subr.mxu0 0.0
  %143 = vmatpush1.msra.mxu0 %v33
  %144 = vmatprep.subr.mxu0 0.0
  %145 = vmatpush1.msra.mxu0 %v34
  %146 = vmatprep.subr.mxu0 0.0
  %147 = vmatpush1.msra.mxu0 %v35
  %148 = vmatprep.subr.mxu0 0.0
  %149 = vmatpush1.msra.mxu0 %v36
  %150 = vmatprep.subr.mxu0 0.0
  %151 = vmatpush1.msra.mxu0 %v37
  %152 = vmatprep.subr.mxu0 0.0
  %153 = vmatpush1.msra.mxu0 %v38
  %154 = vmatprep.subr.mxu0 0.0
  %155 = vmatpush1.msra.mxu0 %v39
  %156 = vmatprep.subr.mxu0 0.0
  %157 = vmatpush1.msra.mxu0 %v40
  %158 = vmatprep.subr.mxu0 0.0
  %159 = vmatpush1.msra.mxu0 %v41
  %160 = vmatprep.subr.mxu0 0.0
  %161 = vmatpush1.msra.mxu0 %v42
  %162 = vmatprep.subr.mxu0 0.0
  %163 = vmatpush1.msra.mxu0 %v43
  %164 = vmatprep.subr.mxu0 0.0
  %165 = vmatpush1.msra.mxu0 %v44
  %166 = vmatprep.subr.mxu0 0.0
  %167 = vmatpush1.msra.mxu0 %v45
  %168 = vmatprep.subr.mxu0 0.0
  %169 = vmatpush1.msra.mxu0 0.0
  %170 = vmatprep.subr.mxu0 0.0
  %171 = vmatpush1.msra.mxu0 0.0
  %172 = vmatprep.subr.mxu0 0.0
  %173 = vmatpush1.msra.mxu0 0.0
  %174 = vmatprep.subr.mxu0 0.0
  %175 = vmatpush1.msra.mxu0 0.0
  %176 = vmatprep.subr.mxu0 0.0
  %177 = vmatpush1.msra.mxu0 0.0
  %178 = vmatprep.subr.mxu0 0.0
  %179 = vmatpush1.msra.mxu0 0.0
  %180 = vmatprep.subr.mxu0 0.0
  %181 = vmatpush1.msra.mxu0 0.0
  %182 = vmatprep.subr.mxu0 0.0
  %183 = vmatpush1.msra.mxu0 0.0
  %184 = vmatprep.subr.mxu0 0.0
  %185 = vmatpush1.msra.mxu0 0.0
  %186 = vmatprep.subr.mxu0 0.0
  %187 = vmatpush1.msra.mxu0 0.0
  %188 = vmatprep.subr.mxu0 0.0
  %189 = vmatpush1.msra.mxu0 0.0
  %190 = vmatprep.subr.mxu0 0.0
  %191 = vmatpush1.msra.mxu0 0.0
  %192 = vmatprep.subr.mxu0 0.0
  %193 = vmatpush1.msra.mxu0 0.0
  %194 = vmatprep.subr.mxu0 0.0
  %195 = vmatpush1.msra.mxu0 0.0
  %196 = vmatprep.subr.mxu0 0.0
  %197 = vmatpush1.msra.mxu0 0.0
  %198 = vmatprep.subr.mxu0 0.0
  %199 = vmatpush1.msra.mxu0 0.0
  %200 = vmatprep.mubr.f32.mxu0 0.0
  %201 = vmatmul.mubr.f32.gmra.mrb[0].mxu0 %v135
  %v202 = vpop.f32.mrb[0].mxu0
  %v203 = vadd.f32 0.0, %v202
  %v204 = vpop.f32.mrb[0].mxu0
  %205 = vdwg.mxu0
  %v206 = vld [vmem:[%s2] sm:$0xff]
  %207 = vset.pattern.permute.xlu0 0
  %208 = vperm.xlu0 %207, %v206
  %v209 = vpop.permute.xlu0 %208
  %vm210 = vcmp.eq.s32.totalorder %v48, %v209
  %v211 = vsel %vm210, 1, 0
  %v212 = vcvt.s32.f32 %v211
  %213 = vmatprep.subr.mxu0 0.0
  %214 = vmatpush1.msra.mxu0 %v30
  %215 = vmatprep.subr.mxu0 0.0
  %216 = vmatpush1.msra.mxu0 %v31
  %217 = vmatprep.subr.mxu0 0.0
  %218 = vmatpush1.msra.mxu0 %v32
  %219 = vmatprep.subr.mxu0 0.0
  %220 = vmatpush1.msra.mxu0 %v33
  %221 = vmatprep.subr.mxu0 0.0
  %222 = vmatpush1.msra.mxu0 %v34
  %223 = vmatprep.subr.mxu0 0.0
  %224 = vmatpush1.msra.mxu0 %v35
  %225 = vmatprep.subr.mxu0 0.0
  %226 = vmatpush1.msra.mxu0 %v36
  %227 = vmatprep.subr.mxu0 0.0
  %228 = vmatpush1.msra.mxu0 %v37
  %229 = vmatprep.subr.mxu0 0.0
  %230 = vmatpush1.msra.mxu0 %v38
  %231 = vmatprep.subr.mxu0 0.0
  %232 = vmatpush1.msra.mxu0 %v39
  %233 = vmatprep.subr.mxu0 0.0
  %234 = vmatpush1.msra.mxu0 %v40
  %235 = vmatprep.subr.mxu0 0.0
  %236 = vmatpush1.msra.mxu0 %v41
  %237 = vmatprep.subr.mxu0 0.0
  %238 = vmatpush1.msra.mxu0 %v42
  %239 = vmatprep.subr.mxu0 0.0
  %240 = vmatpush1.msra.mxu0 %v43
  %241 = vmatprep.subr.mxu0 0.0
  %242 = vmatpush1.msra.mxu0 %v44
  %243 = vmatprep.subr.mxu0 0.0
  %244 = vmatpush1.msra.mxu0 %v45
  %245 = vmatprep.subr.mxu0 0.0
  %246 = vmatpush1.msra.mxu0 0.0
  %247 = vmatprep.subr.mxu0 0.0
  %248 = vmatpush1.msra.mxu0 0.0
  %249 = vmatprep.subr.mxu0 0.0
  %250 = vmatpush1.msra.mxu0 0.0
  %251 = vmatprep.subr.mxu0 0.0
  %252 = vmatpush1.msra.mxu0 0.0
  %253 = vmatprep.subr.mxu0 0.0
  %254 = vmatpush1.msra.mxu0 0.0
  %255 = vmatprep.subr.mxu0 0.0
  %256 = vmatpush1.msra.mxu0 0.0
  %257 = vmatprep.subr.mxu0 0.0
  %258 = vmatpush1.msra.mxu0 0.0
  %259 = vmatprep.subr.mxu0 0.0
  %260 = vmatpush1.msra.mxu0 0.0
  %261 = vmatprep.subr.mxu0 0.0
  %262 = vmatpush1.msra.mxu0 0.0
  %263 = vmatprep.subr.mxu0 0.0
  %264 = vmatpush1.msra.mxu0 0.0
  %265 = vmatprep.subr.mxu0 0.0
  %266 = vmatpush1.msra.mxu0 0.0
  %267 = vmatprep.subr.mxu0 0.0
  %268 = vmatpush1.msra.mxu0 0.0
  %269 = vmatprep.subr.mxu0 0.0
  %270 = vmatpush1.msra.mxu0 0.0
  %271 = vmatprep.subr.mxu0 0.0
  %272 = vmatpush1.msra.mxu0 0.0
  %273 = vmatprep.subr.mxu0 0.0
  %274 = vmatpush1.msra.mxu0 0.0
  %275 = vmatprep.subr.mxu0 0.0
  %276 = vmatpush1.msra.mxu0 0.0
  %277 = vmatprep.mubr.f32.mxu0 0.0
  %278 = vmatmul.mubr.f32.gmra.mrb[0].mxu0 %v212
  %v279 = vpop.f32.mrb[0].mxu0
  %v280 = vadd.f32 0.0, %v279
  %v281 = vpop.f32.mrb[0].mxu0
  %282 = vdwg.mxu0
  %v283 = vmul.f32 %v126, %v203
  %vm284 = vcmask 261120
  %v285 = vsel %vm284, %v283, 0.0
  %286 = vadd.xlane.f32.xlu0 %v285
  %v287 = vpop.xlane.xlu0 %286
  %vm288 = vcmask 7168
  %289 = vst.msk [vmem:[%s5] sm:$0xff] %vm288, %v287
  %v290 = vmul.f32 %v126, %v280
  %v291 = vsel %vm284, %v290, 0.0
  %292 = vadd.xlane.f32.xlu0 %v291
  %v293 = vpop.xlane.xlu0 %292
  %294 = vst.msk [vmem:[%s6] sm:$0xff] %vm288, %v293
  // Predicated region
  $region22: #{tpu_custom_call.1} parent=0 // pred_check
    _
  $region23: #{tpu_custom_call.1} parent=0 // pred_check_branch
    %296 = sbr.rel (0) target = $region25
  $region24: #{tpu_custom_call.1} parent=0 // pred_region
    _
  $region25: #{tpu_custom_call.1} parent=0 // pred_fallthru
    _
  // Predicated region
  $region26: #{tpu_custom_call.1} parent=0 // pred_check
    _
  $region27: #{tpu_custom_call.1} parent=0 // pred_check_branch
    %298 = sbr.rel (0) target = $region29
  $region28: #{tpu_custom_call.1} parent=0 // pred_region
    _
  $region29: #{tpu_custom_call.1} parent=0 // pred_fallthru
    _
  // Predicated region
  $region30: #{tpu_custom_call.1} parent=0 // pred_check
    _
  $region31: #{tpu_custom_call.1} parent=0 // pred_check_branch
    %300 = sbr.rel (0) target = $region33
  $region32: #{tpu_custom_call.1} parent=0 // pred_region
    _
  $region33: #{tpu_custom_call.1} parent=0 // pred_fallthru
    _
  // Predicated region
  $region34: #{tpu_custom_call.1} parent=0 // pred_check
    _
  $region35: #{tpu_custom_call.1} parent=0 // pred_check_branch
    %302 = sbr.rel (0) target = $region37
  $region36: #{tpu_custom_call.1} parent=0 // pred_region
    _
  $region37: #{tpu_custom_call.1} parent=0 // pred_fallthru
    _

</llo_original>
